<compile_context>
chip_gen: v6e
topology: v6e:2x2x1
jax: 0.10.0
libtpu: 0.0.40
codegen_flags: <defaults>
</compile_context>

<pallas_src>
import jax
import jax.numpy as jnp
from jax.experimental import pallas as pl
from jax.experimental.pallas import tpu as pltpu


def _softsign(v):
    # torch.nn.Softsign: x / (1 + |x|).  approx reciprocal runs on the EUP,
    # freeing VPU bundle slots (tiny relative error, ~1e-3 level end to end).
    return v * pl.reciprocal(1.0 + jnp.abs(v), approx=True)


def actuator_net_kernel(x_ref,
                        w1_ref, b1_ref,
                        w2_ref, b2_ref,
                        w3_ref, b3_ref,
                        w4_ref, b4_ref,
                        w5_ref, b5_ref,
                        o_ref):
    """One batch tile: x_ref [2, Bt] -> o_ref [1, Bt]; weights [out, in], biases [out, 1]."""
    x = x_ref[...]  # [2, Bt]

    # Layer 1 (2 -> 32): K=2 contraction as two broadcast FMAs on the VPU;
    # a K=2 MXU matmul would pad to full systolic depth (~1-2% utilization).
    h = _softsign(w1_ref[:, 0:1] * x[0:1, :]
                  + w1_ref[:, 1:2] * x[1:2, :]
                  + b1_ref[...])                                  # [32, Bt]

    # Layers 2-4 (32 -> 32) on the MXU, batch on the lane/N axis.
    h = _softsign(jnp.dot(w2_ref[...], h, preferred_element_type=jnp.float32)
                  + b2_ref[...])
    h = _softsign(jnp.dot(w3_ref[...], h, preferred_element_type=jnp.float32)
                  + b3_ref[...])
    h = _softsign(jnp.dot(w4_ref[...], h, preferred_element_type=jnp.float32)
                  + b4_ref[...])

    # Layer 5 (32 -> 1): lane-dense [1, Bt] output (unmasked stores).
    out = jnp.dot(w5_ref[...], h, preferred_element_type=jnp.float32) + b5_ref[...]

    o_ref[...] = out.astype(o_ref.dtype)


def actuator_net_forward(x, params, *, b_tile=512):
    """x: [B, 2] float32. params: list of (w [out, in], b [out]) like PyTorch Linear.

    Returns [B, 1] float32.
    """
    x = x.astype(jnp.float32)
    B = x.shape[0]

    # Pick a lane-aligned batch tile (multiple of 128), no bigger than needed.
    b_tile = max(128, min(int(b_tile), 128 * pl.cdiv(B, 128)))
    Bp = b_tile * pl.cdiv(B, b_tile)

    # Transpose to batch-on-lanes and pad batch to the tile boundary.
    x_t = x.T                                      # [2, B]
    if Bp != B:
        x_t = jnp.pad(x_t, ((0, 0), (0, Bp - B)))  # padded lanes stay finite

    # Flatten params into kernel args: W [out, in], b [out, 1].
    flat = []
    for w, b in params:
        flat.append(w.astype(jnp.float32))
        flat.append(b.astype(jnp.float32).reshape(-1, 1))

    grid = (Bp // b_tile,)

    x_spec = pl.BlockSpec((2, b_tile), lambda i: (0, i))
    # Constant block index -> weights DMA'd once, VMEM-resident across all tiles.
    param_specs = [pl.BlockSpec(p.shape, lambda i: (0, 0)) for p in flat]
    out_spec = pl.BlockSpec((1, b_tile), lambda i: (0, i))

    out_t = pl.pallas_call(
        actuator_net_kernel,
        out_shape=jax.ShapeDtypeStruct((1, Bp), jnp.float32),
        grid=grid,
        in_specs=[x_spec] + param_specs,
        out_specs=out_spec,
        compiler_params=pltpu.CompilerParams(
            dimension_semantics=("parallel",)),   # shards batch tiles across TCs on v7x
    )(x_t, *flat)

    return out_t[:, :B].T                          # back to [B, 1]


def init_params(key):
    """Deterministic init mimicking PyTorch's default Linear init
    (uniform(-1/sqrt(fan_in), 1/sqrt(fan_in))).  Weights stored [out, in]."""
    layer_dims = [(2, 32), (32, 32), (32, 32), (32, 32), (32, 1)]
    params = []
    for fan_in, fan_out in layer_dims:
        key, kw, kb = jax.random.split(key, 3)
        bound = 1.0 / (float(fan_in) ** 0.5)
        w = jax.random.uniform(kw, (fan_out, fan_in), jnp.float32,
                               minval=-bound, maxval=bound)
        b = jax.random.uniform(kb, (fan_out,), jnp.float32,
                               minval=-bound, maxval=bound)
        params.append((w, b))
    return params


def reference_forward(x, params):
    """Plain-JAX reference (exact divide) for validation."""
    h = x
    n = len(params)
    for i, (w, b) in enumerate(params):
        h = h @ w.T + b
        if i < n - 1:
            h = h / (1.0 + jnp.abs(h))
    return h


if __name__ == "__main__":
    key = jax.random.PRNGKey(0)
    key, kx = jax.random.split(key)

    B = 8
    x = jax.random.normal(kx, (B, 2), jnp.float32)
    params = init_params(key)

    out = actuator_net_forward(x, params)
    out = jax.block_until_ready(out)

    ref = reference_forward(x, params)
    assert out.shape == (B, 1), out.shape
    # Loose tolerance only because Softsign uses the EUP approx reciprocal;
    # real layout/semantics bugs would show O(1) discrepancies.
    assert jnp.allclose(out, ref, atol=5e-2, rtol=5e-2), (out, ref)

    print("KERNEL_OK")
</pallas_src>

<mosaic_0001>
module attributes {stable_mosaic.version = 11 : i64} {
  func.func @actuator_net_kernel(%arg0: i32, %arg1: memref<2x128xf32, #tpu.memory_space<vmem>>, %arg2: memref<32x2xf32, #tpu.memory_space<vmem>>, %arg3: memref<32x1xf32, #tpu.memory_space<vmem>>, %arg4: memref<32x32xf32, #tpu.memory_space<vmem>>, %arg5: memref<32x1xf32, #tpu.memory_space<vmem>>, %arg6: memref<32x32xf32, #tpu.memory_space<vmem>>, %arg7: memref<32x1xf32, #tpu.memory_space<vmem>>, %arg8: memref<32x32xf32, #tpu.memory_space<vmem>>, %arg9: memref<32x1xf32, #tpu.memory_space<vmem>>, %arg10: memref<1x32xf32, #tpu.memory_space<vmem>>, %arg11: memref<1x1xf32, #tpu.memory_space<vmem>>, %arg12: memref<1x128xf32, #tpu.memory_space<vmem>>) attributes {dimension_semantics = [#tpu.dimension_semantics<parallel>], iteration_bounds = array<i64: 1>, scalar_prefetch = 0 : i64, scratch_operands = 0 : i64, tpu.core_type = #tpu.core_type<tc>, window_params = [{transform_indices = @transform_0, window_bounds = array<i64: 2, 128>}, {pipeline_mode = #tpu.pipeline_mode<synchronous>, transform_indices = @transform_1, window_bounds = array<i64: 32, 2>}, {pipeline_mode = #tpu.pipeline_mode<synchronous>, transform_indices = @transform_2, window_bounds = array<i64: 32, 1>}, {pipeline_mode = #tpu.pipeline_mode<synchronous>, transform_indices = @transform_3, window_bounds = array<i64: 32, 32>}, {pipeline_mode = #tpu.pipeline_mode<synchronous>, transform_indices = @transform_4, window_bounds = array<i64: 32, 1>}, {pipeline_mode = #tpu.pipeline_mode<synchronous>, transform_indices = @transform_5, window_bounds = array<i64: 32, 32>}, {pipeline_mode = #tpu.pipeline_mode<synchronous>, transform_indices = @transform_6, window_bounds = array<i64: 32, 1>}, {pipeline_mode = #tpu.pipeline_mode<synchronous>, transform_indices = @transform_7, window_bounds = array<i64: 32, 32>}, {pipeline_mode = #tpu.pipeline_mode<synchronous>, transform_indices = @transform_8, window_bounds = array<i64: 32, 1>}, {pipeline_mode = #tpu.pipeline_mode<synchronous>, transform_indices = @transform_9, window_bounds = array<i64: 1, 32>}, {pipeline_mode = #tpu.pipeline_mode<synchronous>, transform_indices = @transform_10, window_bounds = array<i64: 1, 1>}, {transform_indices = @transform_11, window_bounds = array<i64: 1, 128>}]} {
    %c0 = arith.constant 0 : index
    %c0_0 = arith.constant 0 : index
    %0 = vector.load %arg1[%c0, %c0_0] : memref<2x128xf32, #tpu.memory_space<vmem>>, vector<2x128xf32>
    %c0_1 = arith.constant 0 : index
    %c0_2 = arith.constant 0 : index
    %1 = vector.load %arg2[%c0_1, %c0_2] : memref<32x2xf32, #tpu.memory_space<vmem>>, vector<32x1xf32>
    %2 = vector.extract_strided_slice %0 {offsets = [0, 0], sizes = [1, 128], strides = [1, 1]} : vector<2x128xf32> to vector<1x128xf32>
    %3 = vector.broadcast %1 : vector<32x1xf32> to vector<32x128xf32>
    %4 = vector.broadcast %2 : vector<1x128xf32> to vector<32x128xf32>
    %5 = arith.mulf %3, %4 : vector<32x128xf32>
    %c0_3 = arith.constant 0 : index
    %c1 = arith.constant 1 : index
    %6 = vector.load %arg2[%c0_3, %c1] : memref<32x2xf32, #tpu.memory_space<vmem>>, vector<32x1xf32>
    %7 = vector.extract_strided_slice %0 {offsets = [1, 0], sizes = [1, 128], strides = [1, 1]} : vector<2x128xf32> to vector<1x128xf32>
    %8 = vector.broadcast %6 : vector<32x1xf32> to vector<32x128xf32>
    %9 = vector.broadcast %7 : vector<1x128xf32> to vector<32x128xf32>
    %10 = arith.mulf %8, %9 : vector<32x128xf32>
    %11 = arith.addf %5, %10 : vector<32x128xf32>
    %c0_4 = arith.constant 0 : index
    %c0_5 = arith.constant 0 : index
    %12 = vector.load %arg3[%c0_4, %c0_5] : memref<32x1xf32, #tpu.memory_space<vmem>>, vector<32x1xf32>
    %13 = vector.broadcast %12 : vector<32x1xf32> to vector<32x128xf32>
    %14 = arith.addf %11, %13 : vector<32x128xf32>
    %15 = math.absf %14 : vector<32x128xf32>
    %cst = arith.constant 1.000000e+00 : f32
    %16 = vector.broadcast %cst : f32 to vector<32x128xf32>
    %17 = arith.addf %16, %15 : vector<32x128xf32>
    %18 = tpu.reciprocal %17 {approx = true} : vector<32x128xf32> -> vector<32x128xf32>
    %19 = arith.mulf %14, %18 : vector<32x128xf32>
    %c0_6 = arith.constant 0 : index
    %c0_7 = arith.constant 0 : index
    %20 = vector.load %arg4[%c0_6, %c0_7] : memref<32x32xf32, #tpu.memory_space<vmem>>, vector<32x32xf32>
    %cst_8 = arith.constant dense<0.000000e+00> : vector<32x128xf32>
    %21 = tpu.matmul %20, %19, %cst_8 {dimension_numbers = #tpu.dot_dimension_numbers<[1], [0], [0], [1], [0, 0, 1, 1], [], []>} : vector<32x32xf32>, vector<32x128xf32>, vector<32x128xf32> -> vector<32x128xf32>
    %c0_9 = arith.constant 0 : index
    %c0_10 = arith.constant 0 : index
    %22 = vector.load %arg5[%c0_9, %c0_10] : memref<32x1xf32, #tpu.memory_space<vmem>>, vector<32x1xf32>
    %23 = vector.broadcast %22 : vector<32x1xf32> to vector<32x128xf32>
    %24 = arith.addf %21, %23 : vector<32x128xf32>
    %25 = math.absf %24 : vector<32x128xf32>
    %cst_11 = arith.constant 1.000000e+00 : f32
    %26 = vector.broadcast %cst_11 : f32 to vector<32x128xf32>
    %27 = arith.addf %26, %25 : vector<32x128xf32>
    %28 = tpu.reciprocal %27 {approx = true} : vector<32x128xf32> -> vector<32x128xf32>
    %29 = arith.mulf %24, %28 : vector<32x128xf32>
    %c0_12 = arith.constant 0 : index
    %c0_13 = arith.constant 0 : index
    %30 = vector.load %arg6[%c0_12, %c0_13] : memref<32x32xf32, #tpu.memory_space<vmem>>, vector<32x32xf32>
    %cst_14 = arith.constant dense<0.000000e+00> : vector<32x128xf32>
    %31 = tpu.matmul %30, %29, %cst_14 {dimension_numbers = #tpu.dot_dimension_numbers<[1], [0], [0], [1], [0, 0, 1, 1], [], []>} : vector<32x32xf32>, vector<32x128xf32>, vector<32x128xf32> -> vector<32x128xf32>
    %c0_15 = arith.constant 0 : index
    %c0_16 = arith.constant 0 : index
    %32 = vector.load %arg7[%c0_15, %c0_16] : memref<32x1xf32, #tpu.memory_space<vmem>>, vector<32x1xf32>
    %33 = vector.broadcast %32 : vector<32x1xf32> to vector<32x128xf32>
    %34 = arith.addf %31, %33 : vector<32x128xf32>
    %35 = math.absf %34 : vector<32x128xf32>
    %cst_17 = arith.constant 1.000000e+00 : f32
    %36 = vector.broadcast %cst_17 : f32 to vector<32x128xf32>
    %37 = arith.addf %36, %35 : vector<32x128xf32>
    %38 = tpu.reciprocal %37 {approx = true} : vector<32x128xf32> -> vector<32x128xf32>
    %39 = arith.mulf %34, %38 : vector<32x128xf32>
    %c0_18 = arith.constant 0 : index
    %c0_19 = arith.constant 0 : index
    %40 = vector.load %arg8[%c0_18, %c0_19] : memref<32x32xf32, #tpu.memory_space<vmem>>, vector<32x32xf32>
    %cst_20 = arith.constant dense<0.000000e+00> : vector<32x128xf32>
    %41 = tpu.matmul %40, %39, %cst_20 {dimension_numbers = #tpu.dot_dimension_numbers<[1], [0], [0], [1], [0, 0, 1, 1], [], []>} : vector<32x32xf32>, vector<32x128xf32>, vector<32x128xf32> -> vector<32x128xf32>
    %c0_21 = arith.constant 0 : index
    %c0_22 = arith.constant 0 : index
    %42 = vector.load %arg9[%c0_21, %c0_22] : memref<32x1xf32, #tpu.memory_space<vmem>>, vector<32x1xf32>
    %43 = vector.broadcast %42 : vector<32x1xf32> to vector<32x128xf32>
    %44 = arith.addf %41, %43 : vector<32x128xf32>
    %45 = math.absf %44 : vector<32x128xf32>
    %cst_23 = arith.constant 1.000000e+00 : f32
    %46 = vector.broadcast %cst_23 : f32 to vector<32x128xf32>
    %47 = arith.addf %46, %45 : vector<32x128xf32>
    %48 = tpu.reciprocal %47 {approx = true} : vector<32x128xf32> -> vector<32x128xf32>
    %49 = arith.mulf %44, %48 : vector<32x128xf32>
    %c0_24 = arith.constant 0 : index
    %c0_25 = arith.constant 0 : index
    %50 = vector.load %arg10[%c0_24, %c0_25] : memref<1x32xf32, #tpu.memory_space<vmem>>, vector<1x32xf32>
    %cst_26 = arith.constant dense<0.000000e+00> : vector<1x128xf32>
    %51 = tpu.matmul %50, %49, %cst_26 {dimension_numbers = #tpu.dot_dimension_numbers<[1], [0], [0], [1], [0, 0, 1, 1], [], []>} : vector<1x32xf32>, vector<32x128xf32>, vector<1x128xf32> -> vector<1x128xf32>
    %c0_27 = arith.constant 0 : index
    %c0_28 = arith.constant 0 : index
    %52 = vector.load %arg11[%c0_27, %c0_28] : memref<1x1xf32, #tpu.memory_space<vmem>>, vector<1x1xf32>
    %53 = vector.broadcast %52 : vector<1x1xf32> to vector<1x128xf32>
    %54 = arith.addf %51, %53 : vector<1x128xf32>
    %c0_29 = arith.constant 0 : index
    %c0_30 = arith.constant 0 : index
    %55 = vector.load %arg12[%c0_29, %c0_30] : memref<1x128xf32, #tpu.memory_space<vmem>>, vector<1x128xf32>
    tpu.vector_store %arg12[%c0_29, %c0_30], %54 {strides = array<i32>} : memref<1x128xf32, #tpu.memory_space<vmem>>, vector<1x128xf32>,
    return
  }
  func.func @transform_0(%arg0: i32) -> (i32, i32) {
    %c0_i32 = arith.constant 0 : i32
    %c0_i32_0 = arith.constant 0 : i32
    return %c0_i32, %arg0 : i32, i32
  }
  func.func @transform_1(%arg0: i32) -> (i32, i32) {
    %c0_i32 = arith.constant 0 : i32
    %c0_i32_0 = arith.constant 0 : i32
    %c0_i32_1 = arith.constant 0 : i32
    return %c0_i32, %c0_i32_0 : i32, i32
  }
  func.func @transform_2(%arg0: i32) -> (i32, i32) {
    %c0_i32 = arith.constant 0 : i32
    %c0_i32_0 = arith.constant 0 : i32
    %c0_i32_1 = arith.constant 0 : i32
    return %c0_i32, %c0_i32_0 : i32, i32
  }
  func.func @transform_3(%arg0: i32) -> (i32, i32) {
    %c0_i32 = arith.constant 0 : i32
    %c0_i32_0 = arith.constant 0 : i32
    %c0_i32_1 = arith.constant 0 : i32
    return %c0_i32, %c0_i32_0 : i32, i32
  }
  func.func @transform_4(%arg0: i32) -> (i32, i32) {
    %c0_i32 = arith.constant 0 : i32
    %c0_i32_0 = arith.constant 0 : i32
    %c0_i32_1 = arith.constant 0 : i32
    return %c0_i32, %c0_i32_0 : i32, i32
  }
  func.func @transform_5(%arg0: i32) -> (i32, i32) {
    %c0_i32 = arith.constant 0 : i32
    %c0_i32_0 = arith.constant 0 : i32
    %c0_i32_1 = arith.constant 0 : i32
    return %c0_i32, %c0_i32_0 : i32, i32
  }
  func.func @transform_6(%arg0: i32) -> (i32, i32) {
    %c0_i32 = arith.constant 0 : i32
    %c0_i32_0 = arith.constant 0 : i32
    %c0_i32_1 = arith.constant 0 : i32
    return %c0_i32, %c0_i32_0 : i32, i32
  }
  func.func @transform_7(%arg0: i32) -> (i32, i32) {
    %c0_i32 = arith.constant 0 : i32
    %c0_i32_0 = arith.constant 0 : i32
    %c0_i32_1 = arith.constant 0 : i32
    return %c0_i32, %c0_i32_0 : i32, i32
  }
  func.func @transform_8(%arg0: i32) -> (i32, i32) {
    %c0_i32 = arith.constant 0 : i32
    %c0_i32_0 = arith.constant 0 : i32
    %c0_i32_1 = arith.constant 0 : i32
    return %c0_i32, %c0_i32_0 : i32, i32
  }
  func.func @transform_9(%arg0: i32) -> (i32, i32) {
    %c0_i32 = arith.constant 0 : i32
    %c0_i32_0 = arith.constant 0 : i32
    %c0_i32_1 = arith.constant 0 : i32
    return %c0_i32, %c0_i32_0 : i32, i32
  }
  func.func @transform_10(%arg0: i32) -> (i32, i32) {
    %c0_i32 = arith.constant 0 : i32
    %c0_i32_0 = arith.constant 0 : i32
    %c0_i32_1 = arith.constant 0 : i32
    return %c0_i32, %c0_i32_0 : i32, i32
  }
  func.func @transform_11(%arg0: i32) -> (i32, i32) {
    %c0_i32 = arith.constant 0 : i32
    %c0_i32_0 = arith.constant 0 : i32
    return %c0_i32, %arg0 : i32, i32
  }
}

</mosaic_0001>

<llo_original>
// kernel: tpu_custom_call.1
$region0: #{tpu_custom_call.1}
  #allocation0 [shape = 'u32[]', space=smem, size = 0x4, offset = 0x4, fixed_abs, tag = 'smem constant byte address 0x4 - core index']
  #allocation1 [shape = 'u32[144,128]{1,0:T(1,128)}', space=vmem, size = 0x12000, scoped, tag = 'internal scratch']
  #allocation2 [shape = 'f32[1,1]{1,0:T(1,128)S(1)}', space=vmem, size = 0x200, scoped, tag = 'scoped memory for tpu_custom_call.1']
  %s0 = inlined_call_operand.vmem [shape: f32[2,128], index: 0, kind: input, shape index: {}]
  %s1 = inlined_call_operand.vmem [shape: f32[32,2], index: 1, kind: input, shape index: {}]
  %s2 = inlined_call_operand.vmem [shape: f32[32,1], index: 2, kind: input, shape index: {}]
  %s3 = inlined_call_operand.vmem [shape: f32[32,32], index: 3, kind: input, shape index: {}]
  %s4 = inlined_call_operand.vmem [shape: f32[32,1], index: 4, kind: input, shape index: {}]
  %s5 = inlined_call_operand.vmem [shape: f32[32,32], index: 5, kind: input, shape index: {}]
  %s6 = inlined_call_operand.vmem [shape: f32[32,1], index: 6, kind: input, shape index: {}]
  %s7 = inlined_call_operand.vmem [shape: f32[32,32], index: 7, kind: input, shape index: {}]
  %s8 = inlined_call_operand.vmem [shape: f32[32,1], index: 8, kind: input, shape index: {}]
  %s9 = inlined_call_operand.vmem [shape: f32[1,32], index: 9, kind: input, shape index: {}]
  %s10 = inlined_call_operand.<no memory space> [shape: f32[1,1], index: 10, kind: input, shape index: {}]
  %s11 = inlined_call_operand.hbm [shape: f32[1,128], index: 11, kind: output, shape index: {}]
  %s12 = sld [smem:[#allocation0]]
  $region54: #{tpu_custom_call.1} parent=0
    _
  %s14 = ssub.s32 1, %s12
  %s15 = scalar_select 0, %s14, %s12
  %v16 = vstv %s10
  %17 = vst [vmem:[#allocation2] sm:$0x1] %v16
  $region1: #{tpu_custom_call.1} parent=0
    #allocation3 [shape = 'u8[512]{0}', space=vmem, size = 0x400, scoped, tag = 'output window, operand 0, single buffered']
    #allocation4 [shape = 's32[1]{0}', space=sflag, size = 0x4, scoped, tag = 'scoped memory for tpu_custom_call.1']
    %18 = vsyncpa [#allocation4], 0
    // Predicated region
    $region2: #{tpu_custom_call.1} parent=1 // pred_check
      _
    $region3: #{tpu_custom_call.1} parent=1 // pred_check_branch
      %20 = sbr.rel (0) target = $region5
    $region4: #{tpu_custom_call.1} parent=1 // pred_region
      _
    $region5: #{tpu_custom_call.1} parent=1 // pred_fallthru
      _
    // Predicated region
    $region6: #{tpu_custom_call.1} parent=1 // pred_check
      _
    $region7: #{tpu_custom_call.1} parent=1 // pred_check_branch
      %22 = sbr.rel (0) target = $region9
    $region8: #{tpu_custom_call.1} parent=1 // pred_region
      _
    $region9: #{tpu_custom_call.1} parent=1 // pred_fallthru
      _
    // Predicated region
    $region10: #{tpu_custom_call.1} parent=1 // pred_check
      _
    $region11: #{tpu_custom_call.1} parent=1 // pred_check_branch
      %24 = sbr.rel (0) target = $region13
    $region12: #{tpu_custom_call.1} parent=1 // pred_region
      _
    $region13: #{tpu_custom_call.1} parent=1 // pred_fallthru
      _
    // Predicated region
    $region14: #{tpu_custom_call.1} parent=1 // pred_check
      _
    $region15: #{tpu_custom_call.1} parent=1 // pred_check_branch
      %26 = sbr.rel (0) target = $region17
    $region16: #{tpu_custom_call.1} parent=1 // pred_region
      _
    $region17: #{tpu_custom_call.1} parent=1 // pred_fallthru
      _
    // Predicated region
    $region18: #{tpu_custom_call.1} parent=1 // pred_check
      _
    $region19: #{tpu_custom_call.1} parent=1 // pred_check_branch
      %28 = sbr.rel (0) target = $region21
    $region20: #{tpu_custom_call.1} parent=1 // pred_region
      _
    $region21: #{tpu_custom_call.1} parent=1 // pred_fallthru
      _
    // Predicated region
    $region22: #{tpu_custom_call.1} parent=1 // pred_check
      _
    $region23: #{tpu_custom_call.1} parent=1 // pred_check_branch
      %30 = sbr.rel (0) target = $region25
    $region24: #{tpu_custom_call.1} parent=1 // pred_region
      _
    $region25: #{tpu_custom_call.1} parent=1 // pred_fallthru
      _
    // Predicated region
    $region26: #{tpu_custom_call.1} parent=1 // pred_check
      _
    $region27: #{tpu_custom_call.1} parent=1 // pred_check_branch
      %32 = sbr.rel (0) target = $region29
    $region28: #{tpu_custom_call.1} parent=1 // pred_region
      _
    $region29: #{tpu_custom_call.1} parent=1 // pred_fallthru
      _
    // Predicated region
    $region30: #{tpu_custom_call.1} parent=1 // pred_check
      _
    $region31: #{tpu_custom_call.1} parent=1 // pred_check_branch
      %34 = sbr.rel (0) target = $region33
    $region32: #{tpu_custom_call.1} parent=1 // pred_region
      _
    $region33: #{tpu_custom_call.1} parent=1 // pred_fallthru
      _
    // Predicated region
    $region34: #{tpu_custom_call.1} parent=1 // pred_check
      _
    $region35: #{tpu_custom_call.1} parent=1 // pred_check_branch
      %36 = sbr.rel (0) target = $region37
    $region36: #{tpu_custom_call.1} parent=1 // pred_region
      _
    $region37: #{tpu_custom_call.1} parent=1 // pred_fallthru
      _
    // Predicated region
    $region38: #{tpu_custom_call.1} parent=1 // pred_check
      _
    $region39: #{tpu_custom_call.1} parent=1 // pred_check_branch
      %38 = sbr.rel (0) target = $region41
    $region40: #{tpu_custom_call.1} parent=1 // pred_region
      _
    $region41: #{tpu_custom_call.1} parent=1 // pred_fallthru
      _
    // Predicated region
    $region42: #{tpu_custom_call.1} parent=1 // pred_check
      _
    $region43: #{tpu_custom_call.1} parent=1 // pred_check_branch
      %40 = sbr.rel (0) target = $region45
    $region44: #{tpu_custom_call.1} parent=1 // pred_region
      _
    $region45: #{tpu_custom_call.1} parent=1 // pred_fallthru
      _
    %v41 = vld [vmem:[%s0] sm:$0x3]
    %v42 = vld [vmem:[%s1] sm:$0xff]
    %v43 = vld [vmem:[%s1 + $0x8] sm:$0xff]
    %v44 = vld [vmem:[%s1 + $0x10] sm:$0xff]
    %v45 = vld [vmem:[%s1 + $0x18] sm:$0xff]
    %47 = vset.pattern.permute.xlu0 0
    %48 = vperm.xlu0 %47, %v42
    %v49 = vpop.permute.xlu0 %48
    %52 = vset.pattern.permute.xlu0 0
    %53 = vperm.xlu0 %52, %v43
    %v54 = vpop.permute.xlu0 %53
    %57 = vset.pattern.permute.xlu0 0
    %58 = vperm.xlu0 %57, %v44
    %v59 = vpop.permute.xlu0 %58
    %62 = vset.pattern.permute.xlu0 0
    %63 = vperm.xlu0 %62, %v45
    %v64 = vpop.permute.xlu0 %63
    %v66 = vlaneseq
    %v67 = vshrl.u32 %v66, 7
    %v68 = vsub.s32 0, %v67
    %v69 = vrot.slane %v41, %v68
    %v70 = vmul.f32 %v49, %v69
    %v71 = vmul.f32 %v54, %v69
    %v72 = vmul.f32 %v59, %v69
    %v73 = vmul.f32 %v64, %v69
    %74 = vset.pattern.permute.xlu0 1
    %75 = vperm.xlu0 %74, %v42
    %v76 = vpop.permute.xlu0 %75
    %78 = vset.pattern.permute.xlu0 1
    %79 = vperm.xlu0 %78, %v43
    %v80 = vpop.permute.xlu0 %79
    %82 = vset.pattern.permute.xlu0 1
    %83 = vperm.xlu0 %82, %v44
    %v84 = vpop.permute.xlu0 %83
    %86 = vset.pattern.permute.xlu0 1
    %87 = vperm.xlu0 %86, %v45
    %v88 = vpop.permute.xlu0 %87
    %v90 = vlaneseq
    %v91 = vshrl.u32 %v90, 7
    %v92 = vsub.s32 1, %v91
    %v93 = vrot.slane %v41, %v92
    %v94 = vmul.f32 %v76, %v93
    %v95 = vmul.f32 %v80, %v93
    %v96 = vmul.f32 %v84, %v93
    %v97 = vmul.f32 %v88, %v93
    %v98 = vadd.f32 %v70, %v94
    %v99 = vadd.f32 %v71, %v95
    %v100 = vadd.f32 %v72, %v96
    %v101 = vadd.f32 %v73, %v97
    %v102 = vld [vmem:[%s2] sm:$0xff]
    %v103 = vld [vmem:[%s2 + $0x8] sm:$0xff]
    %v104 = vld [vmem:[%s2 + $0x10] sm:$0xff]
    %v105 = vld [vmem:[%s2 + $0x18] sm:$0xff]
    %107 = vset.pattern.permute.xlu0 0
    %108 = vperm.xlu0 %107, %v102
    %v109 = vpop.permute.xlu0 %108
    %112 = vset.pattern.permute.xlu0 0
    %113 = vperm.xlu0 %112, %v103
    %v114 = vpop.permute.xlu0 %113
    %117 = vset.pattern.permute.xlu0 0
    %118 = vperm.xlu0 %117, %v104
    %v119 = vpop.permute.xlu0 %118
    %122 = vset.pattern.permute.xlu0 0
    %123 = vperm.xlu0 %122, %v105
    %v124 = vpop.permute.xlu0 %123
    %v126 = vadd.f32 %v98, %v109
    %v127 = vadd.f32 %v99, %v114
    %v128 = vadd.f32 %v100, %v119
    %v129 = vadd.f32 %v101, %v124
    %v130 = vand.u32 2147483647, %v126
    %v131 = vand.u32 2147483647, %v127
    %v132 = vand.u32 2147483647, %v128
    %v133 = vand.u32 2147483647, %v129
    %v134 = vadd.f32 %v130, 1.0
    %v135 = vadd.f32 %v131, 1.0
    %v136 = vadd.f32 %v132, 1.0
    %v137 = vadd.f32 %v133, 1.0
    %v138 = vrcp.pop %v134
    %v139 = vrcp.pop %v135
    %v140 = vrcp.pop %v136
    %v141 = vrcp.pop %v137
    %v142 = vmul.f32 %v126, %v138
    %v143 = vmul.f32 %v127, %v139
    %v144 = vmul.f32 %v128, %v140
    %v145 = vmul.f32 %v129, %v141
    %v146 = vld [vmem:[%s3] sm:$0xff]
    %v147 = vld [vmem:[%s3 + $0x8] sm:$0xff]
    %v148 = vld [vmem:[%s3 + $0x10] sm:$0xff]
    %v149 = vld [vmem:[%s3 + $0x18] sm:$0xff]
    %v150 = vld [vmem:[%s4] sm:$0xff]
    %v151 = vld [vmem:[%s4 + $0x8] sm:$0xff]
    %v152 = vld [vmem:[%s4 + $0x10] sm:$0xff]
    %v153 = vld [vmem:[%s4 + $0x18] sm:$0xff]
    %155 = vset.pattern.permute.xlu0 0
    %156 = vperm.xlu0 %155, %v150
    %v157 = vpop.permute.xlu0 %156
    %160 = vset.pattern.permute.xlu0 0
    %161 = vperm.xlu0 %160, %v151
    %v162 = vpop.permute.xlu0 %161
    %165 = vset.pattern.permute.xlu0 0
    %166 = vperm.xlu0 %165, %v152
    %v167 = vpop.permute.xlu0 %166
    %170 = vset.pattern.permute.xlu0 0
    %171 = vperm.xlu0 %170, %v153
    %v172 = vpop.permute.xlu0 %171
    %vm174 = vcmask 261120
    %v176 = vsel %vm174, %v146, 0
    %v179 = vsel %vm174, %v147, 0
    %v182 = vsel %vm174, %v148, 0
    %v185 = vsel %vm174, %v149, 0
    %187 = vmatprep.subr.mxu0 0.0
    %188 = vmatpush1.msra.mxu0 0.0
    %189 = vmatprep.subr.mxu0 0.0
    %190 = vmatpush1.msra.mxu0 0.0
    %191 = vmatprep.subr.mxu0 0.0
    %192 = vmatpush1.msra.mxu0 0.0
    %193 = vmatprep.subr.mxu0 0.0
    %194 = vmatpush1.msra.mxu0 0.0
    %195 = vmatprep.subr.mxu0 0.0
    %196 = vmatpush1.msra.mxu0 0.0
    %197 = vmatprep.subr.mxu0 0.0
    %198 = vmatpush1.msra.mxu0 0.0
    %199 = vmatprep.subr.mxu0 0.0
    %200 = vmatpush1.msra.mxu0 0.0
    %201 = vmatprep.subr.mxu0 0.0
    %202 = vmatpush1.msra.mxu0 0.0
    %203 = vmatprep.subr.mxu0 0.0
    %204 = vmatpush1.msra.mxu0 0.0
    %205 = vmatprep.subr.mxu0 0.0
    %206 = vmatpush1.msra.mxu0 0.0
    %207 = vmatprep.subr.mxu0 0.0
    %208 = vmatpush1.msra.mxu0 0.0
    %209 = vmatprep.subr.mxu0 0.0
    %210 = vmatpush1.msra.mxu0 0.0
    %211 = vmatprep.subr.mxu0 0.0
    %212 = vmatpush1.msra.mxu0 %v145
    %213 = vmatprep.subr.mxu0 0.0
    %214 = vmatpush1.msra.mxu0 %v144
    %215 = vmatprep.subr.mxu0 0.0
    %216 = vmatpush1.msra.mxu0 %v143
    %217 = vmatprep.subr.mxu0 0.0
    %218 = vmatpush1.msra.mxu0 %v142
    %219 = vmatprep.subr.mxu0 0.0
    %220 = vmatpush2.msra.mxu0 0.0
    %221 = vmatprep.subr.mxu0 0.0
    %222 = vmatpush2.msra.mxu0 0.0
    %223 = vmatprep.subr.mxu0 0.0
    %224 = vmatpush2.msra.mxu0 0.0
    %225 = vmatprep.subr.mxu0 0.0
    %226 = vmatpush2.msra.mxu0 0.0
    %227 = vmatprep.subr.mxu0 0.0
    %228 = vmatpush2.msra.mxu0 0.0
    %229 = vmatprep.subr.mxu0 0.0
    %230 = vmatpush2.msra.mxu0 0.0
    %231 = vmatprep.subr.mxu0 0.0
    %232 = vmatpush2.msra.mxu0 0.0
    %233 = vmatprep.subr.mxu0 0.0
    %234 = vmatpush2.msra.mxu0 0.0
    %235 = vmatprep.subr.mxu0 0.0
    %236 = vmatpush2.msra.mxu0 0.0
    %237 = vmatprep.subr.mxu0 0.0
    %238 = vmatpush2.msra.mxu0 0.0
    %239 = vmatprep.subr.mxu0 0.0
    %240 = vmatpush2.msra.mxu0 0.0
    %241 = vmatprep.subr.mxu0 0.0
    %242 = vmatpush2.msra.mxu0 0.0
    %243 = vmatprep.subr.mxu0 0.0
    %244 = vmatpush2.msra.mxu0 0.0
    %245 = vmatprep.subr.mxu0 0.0
    %246 = vmatpush2.msra.mxu0 0.0
    %247 = vmatprep.subr.mxu0 0.0
    %248 = vmatpush2.msra.mxu0 0.0
    %249 = vmatprep.subr.mxu0 0.0
    %250 = vmatpush2.msra.mxu0 0.0
    %251 = vmatprep.mubr.f32.mxu0 0.0
    %252 = vmatmul.mubr.f32.gmra.mxu0 %v176
    %v253 = vpop.f32.mrf.mxu0
    %v254 = vadd.f32 %v157, %v253
    %v255 = vpop.f32.mrf.mxu0
    %256 = vmatprep.mubr.f32.mxu0 0.0
    %257 = vmatmul.mubr.f32.gmra.mxu0 %v179
    %v258 = vpop.f32.mrf.mxu0
    %v259 = vadd.f32 %v162, %v258
    %v260 = vpop.f32.mrf.mxu0
    %261 = vmatprep.mubr.f32.mxu0 0.0
    %262 = vmatmul.mubr.f32.gmra.mxu0 %v182
    %v263 = vpop.f32.mrf.mxu0
    %v264 = vadd.f32 %v167, %v263
    %v265 = vpop.f32.mrf.mxu0
    %266 = vmatprep.mubr.f32.mxu0 0.0
    %267 = vmatmul.mubr.f32.gmra.mxu0 %v185
    %v268 = vpop.f32.mrf.mxu0
    %v269 = vadd.f32 %v172, %v268
    %v270 = vpop.f32.mrf.mxu0
    %271 = vdwg.mxu0
    %v272 = vand.u32 2147483647, %v254
    %v273 = vand.u32 2147483647, %v259
    %v274 = vand.u32 2147483647, %v264
    %v275 = vand.u32 2147483647, %v269
    %v276 = vadd.f32 %v272, 1.0
    %v277 = vadd.f32 %v273, 1.0
    %v278 = vadd.f32 %v274, 1.0
    %v279 = vadd.f32 %v275, 1.0
    %v280 = vrcp.pop %v276
    %v281 = vrcp.pop %v277
    %v282 = vrcp.pop %v278
    %v283 = vrcp.pop %v279
    %v284 = vmul.f32 %v254, %v280
    %v285 = vmul.f32 %v259, %v281
    %v286 = vmul.f32 %v264, %v282
    %v287 = vmul.f32 %v269, %v283
    %v288 = vld [vmem:[%s5] sm:$0xff]
    %v289 = vld [vmem:[%s5 + $0x8] sm:$0xff]
    %v290 = vld [vmem:[%s5 + $0x10] sm:$0xff]
    %v291 = vld [vmem:[%s5 + $0x18] sm:$0xff]
    %v292 = vld [vmem:[%s6] sm:$0xff]
    %v293 = vld [vmem:[%s6 + $0x8] sm:$0xff]
    %v294 = vld [vmem:[%s6 + $0x10] sm:$0xff]
    %v295 = vld [vmem:[%s6 + $0x18] sm:$0xff]
    %297 = vset.pattern.permute.xlu0 0
    %298 = vperm.xlu0 %297, %v292
    %v299 = vpop.permute.xlu0 %298
    %302 = vset.pattern.permute.xlu0 0
    %303 = vperm.xlu0 %302, %v293
    %v304 = vpop.permute.xlu0 %303
    %307 = vset.pattern.permute.xlu0 0
    %308 = vperm.xlu0 %307, %v294
    %v309 = vpop.permute.xlu0 %308
    %312 = vset.pattern.permute.xlu0 0
    %313 = vperm.xlu0 %312, %v295
    %v314 = vpop.permute.xlu0 %313
    %v317 = vsel %vm174, %v288, 0
    %v320 = vsel %vm174, %v289, 0
    %v323 = vsel %vm174, %v290, 0
    %v326 = vsel %vm174, %v291, 0
    %328 = vmatprep.subr.mxu0 0.0
    %329 = vmatpush1.msra.mxu0 0.0
    %330 = vmatprep.subr.mxu0 0.0
    %331 = vmatpush1.msra.mxu0 0.0
    %332 = vmatprep.subr.mxu0 0.0
    %333 = vmatpush1.msra.mxu0 0.0
    %334 = vmatprep.subr.mxu0 0.0
    %335 = vmatpush1.msra.mxu0 0.0
    %336 = vmatprep.subr.mxu0 0.0
    %337 = vmatpush1.msra.mxu0 0.0
    %338 = vmatprep.subr.mxu0 0.0
    %339 = vmatpush1.msra.mxu0 0.0
    %340 = vmatprep.subr.mxu0 0.0
    %341 = vmatpush1.msra.mxu0 0.0
    %342 = vmatprep.subr.mxu0 0.0
    %343 = vmatpush1.msra.mxu0 0.0
    %344 = vmatprep.subr.mxu0 0.0
    %345 = vmatpush1.msra.mxu0 0.0
    %346 = vmatprep.subr.mxu0 0.0
    %347 = vmatpush1.msra.mxu0 0.0
    %348 = vmatprep.subr.mxu0 0.0
    %349 = vmatpush1.msra.mxu0 0.0
    %350 = vmatprep.subr.mxu0 0.0
    %351 = vmatpush1.msra.mxu0 0.0
    %352 = vmatprep.subr.mxu0 0.0
    %353 = vmatpush1.msra.mxu0 %v287
    %354 = vmatprep.subr.mxu0 0.0
    %355 = vmatpush1.msra.mxu0 %v286
    %356 = vmatprep.subr.mxu0 0.0
    %357 = vmatpush1.msra.mxu0 %v285
    %358 = vmatprep.subr.mxu0 0.0
    %359 = vmatpush1.msra.mxu0 %v284
    %360 = vmatprep.subr.mxu0 0.0
    %361 = vmatpush2.msra.mxu0 0.0
    %362 = vmatprep.subr.mxu0 0.0
    %363 = vmatpush2.msra.mxu0 0.0
    %364 = vmatprep.subr.mxu0 0.0
    %365 = vmatpush2.msra.mxu0 0.0
    %366 = vmatprep.subr.mxu0 0.0
    %367 = vmatpush2.msra.mxu0 0.0
    %368 = vmatprep.subr.mxu0 0.0
    %369 = vmatpush2.msra.mxu0 0.0
    %370 = vmatprep.subr.mxu0 0.0
    %371 = vmatpush2.msra.mxu0 0.0
    %372 = vmatprep.subr.mxu0 0.0
    %373 = vmatpush2.msra.mxu0 0.0
    %374 = vmatprep.subr.mxu0 0.0
    %375 = vmatpush2.msra.mxu0 0.0
    %376 = vmatprep.subr.mxu0 0.0
    %377 = vmatpush2.msra.mxu0 0.0
    %378 = vmatprep.subr.mxu0 0.0
    %379 = vmatpush2.msra.mxu0 0.0
    %380 = vmatprep.subr.mxu0 0.0
    %381 = vmatpush2.msra.mxu0 0.0
    %382 = vmatprep.subr.mxu0 0.0
    %383 = vmatpush2.msra.mxu0 0.0
    %384 = vmatprep.subr.mxu0 0.0
    %385 = vmatpush2.msra.mxu0 0.0
    %386 = vmatprep.subr.mxu0 0.0
    %387 = vmatpush2.msra.mxu0 0.0
    %388 = vmatprep.subr.mxu0 0.0
    %389 = vmatpush2.msra.mxu0 0.0
    %390 = vmatprep.subr.mxu0 0.0
    %391 = vmatpush2.msra.mxu0 0.0
    %392 = vmatprep.mubr.f32.mxu0 0.0
    %393 = vmatmul.mubr.f32.gmra.mxu0 %v317
    %v394 = vpop.f32.mrf.mxu0
    %v395 = vadd.f32 %v299, %v394
    %v396 = vpop.f32.mrf.mxu0
    %397 = vmatprep.mubr.f32.mxu0 0.0
    %398 = vmatmul.mubr.f32.gmra.mxu0 %v320
    %v399 = vpop.f32.mrf.mxu0
    %v400 = vadd.f32 %v304, %v399
    %v401 = vpop.f32.mrf.mxu0
    %402 = vmatprep.mubr.f32.mxu0 0.0
    %403 = vmatmul.mubr.f32.gmra.mxu0 %v323
    %v404 = vpop.f32.mrf.mxu0
    %v405 = vadd.f32 %v309, %v404
    %v406 = vpop.f32.mrf.mxu0
    %407 = vmatprep.mubr.f32.mxu0 0.0
    %408 = vmatmul.mubr.f32.gmra.mxu0 %v326
    %v409 = vpop.f32.mrf.mxu0
    %v410 = vadd.f32 %v314, %v409
    %v411 = vpop.f32.mrf.mxu0
    %412 = vdwg.mxu0
    %v413 = vand.u32 2147483647, %v395
    %v414 = vand.u32 2147483647, %v400
    %v415 = vand.u32 2147483647, %v405
    %v416 = vand.u32 2147483647, %v410
    %v417 = vadd.f32 %v413, 1.0
    %v418 = vadd.f32 %v414, 1.0
    %v419 = vadd.f32 %v415, 1.0
    %v420 = vadd.f32 %v416, 1.0
    %v421 = vrcp.pop %v417
    %v422 = vrcp.pop %v418
    %v423 = vrcp.pop %v419
    %v424 = vrcp.pop %v420
    %v425 = vmul.f32 %v395, %v421
    %v426 = vmul.f32 %v400, %v422
    %v427 = vmul.f32 %v405, %v423
    %v428 = vmul.f32 %v410, %v424
    %v429 = vld [vmem:[%s7] sm:$0xff]
    %v430 = vld [vmem:[%s7 + $0x8] sm:$0xff]
    %v431 = vld [vmem:[%s7 + $0x10] sm:$0xff]
    %v432 = vld [vmem:[%s7 + $0x18] sm:$0xff]
    %v433 = vld [vmem:[%s8] sm:$0xff]
    %v434 = vld [vmem:[%s8 + $0x8] sm:$0xff]
    %v435 = vld [vmem:[%s8 + $0x10] sm:$0xff]
    %v436 = vld [vmem:[%s8 + $0x18] sm:$0xff]
    %438 = vset.pattern.permute.xlu0 0
    %439 = vperm.xlu0 %438, %v433
    %v440 = vpop.permute.xlu0 %439
    %443 = vset.pattern.permute.xlu0 0
    %444 = vperm.xlu0 %443, %v434
    %v445 = vpop.permute.xlu0 %444
    %448 = vset.pattern.permute.xlu0 0
    %449 = vperm.xlu0 %448, %v435
    %v450 = vpop.permute.xlu0 %449
    %453 = vset.pattern.permute.xlu0 0
    %454 = vperm.xlu0 %453, %v436
    %v455 = vpop.permute.xlu0 %454
    %v458 = vsel %vm174, %v429, 0
    %v461 = vsel %vm174, %v430, 0
    %v464 = vsel %vm174, %v431, 0
    %v467 = vsel %vm174, %v432, 0
    %469 = vmatprep.subr.mxu0 0.0
    %470 = vmatpush1.msra.mxu0 0.0
    %471 = vmatprep.subr.mxu0 0.0
    %472 = vmatpush1.msra.mxu0 0.0
    %473 = vmatprep.subr.mxu0 0.0
    %474 = vmatpush1.msra.mxu0 0.0
    %475 = vmatprep.subr.mxu0 0.0
    %476 = vmatpush1.msra.mxu0 0.0
    %477 = vmatprep.subr.mxu0 0.0
    %478 = vmatpush1.msra.mxu0 0.0
    %479 = vmatprep.subr.mxu0 0.0
    %480 = vmatpush1.msra.mxu0 0.0
    %481 = vmatprep.subr.mxu0 0.0
    %482 = vmatpush1.msra.mxu0 0.0
    %483 = vmatprep.subr.mxu0 0.0
    %484 = vmatpush1.msra.mxu0 0.0
    %485 = vmatprep.subr.mxu0 0.0
    %486 = vmatpush1.msra.mxu0 0.0
    %487 = vmatprep.subr.mxu0 0.0
    %488 = vmatpush1.msra.mxu0 0.0
    %489 = vmatprep.subr.mxu0 0.0
    %490 = vmatpush1.msra.mxu0 0.0
    %491 = vmatprep.subr.mxu0 0.0
    %492 = vmatpush1.msra.mxu0 0.0
    %493 = vmatprep.subr.mxu0 0.0
    %494 = vmatpush1.msra.mxu0 %v428
    %495 = vmatprep.subr.mxu0 0.0
    %496 = vmatpush1.msra.mxu0 %v427
    %497 = vmatprep.subr.mxu0 0.0
    %498 = vmatpush1.msra.mxu0 %v426
    %499 = vmatprep.subr.mxu0 0.0
    %500 = vmatpush1.msra.mxu0 %v425
    %501 = vmatprep.subr.mxu0 0.0
    %502 = vmatpush2.msra.mxu0 0.0
    %503 = vmatprep.subr.mxu0 0.0
    %504 = vmatpush2.msra.mxu0 0.0
    %505 = vmatprep.subr.mxu0 0.0
    %506 = vmatpush2.msra.mxu0 0.0
    %507 = vmatprep.subr.mxu0 0.0
    %508 = vmatpush2.msra.mxu0 0.0
    %509 = vmatprep.subr.mxu0 0.0
    %510 = vmatpush2.msra.mxu0 0.0
    %511 = vmatprep.subr.mxu0 0.0
    %512 = vmatpush2.msra.mxu0 0.0
    %513 = vmatprep.subr.mxu0 0.0
    %514 = vmatpush2.msra.mxu0 0.0
    %515 = vmatprep.subr.mxu0 0.0
    %516 = vmatpush2.msra.mxu0 0.0
    %517 = vmatprep.subr.mxu0 0.0
    %518 = vmatpush2.msra.mxu0 0.0
    %519 = vmatprep.subr.mxu0 0.0
    %520 = vmatpush2.msra.mxu0 0.0
    %521 = vmatprep.subr.mxu0 0.0
    %522 = vmatpush2.msra.mxu0 0.0
    %523 = vmatprep.subr.mxu0 0.0
    %524 = vmatpush2.msra.mxu0 0.0
    %525 = vmatprep.subr.mxu0 0.0
    %526 = vmatpush2.msra.mxu0 0.0
    %527 = vmatprep.subr.mxu0 0.0
    %528 = vmatpush2.msra.mxu0 0.0
    %529 = vmatprep.subr.mxu0 0.0
    %530 = vmatpush2.msra.mxu0 0.0
    %531 = vmatprep.subr.mxu0 0.0
    %532 = vmatpush2.msra.mxu0 0.0
    %533 = vmatprep.mubr.f32.mxu0 0.0
    %534 = vmatmul.mubr.f32.gmra.mxu0 %v458
    %v535 = vpop.f32.mrf.mxu0
    %v536 = vadd.f32 %v440, %v535
    %v537 = vpop.f32.mrf.mxu0
    %538 = vmatprep.mubr.f32.mxu0 0.0
    %539 = vmatmul.mubr.f32.gmra.mxu0 %v461
    %v540 = vpop.f32.mrf.mxu0
    %v541 = vadd.f32 %v445, %v540
    %v542 = vpop.f32.mrf.mxu0
    %543 = vmatprep.mubr.f32.mxu0 0.0
    %544 = vmatmul.mubr.f32.gmra.mxu0 %v464
    %v545 = vpop.f32.mrf.mxu0
    %v546 = vadd.f32 %v450, %v545
    %v547 = vpop.f32.mrf.mxu0
    %548 = vmatprep.mubr.f32.mxu0 0.0
    %549 = vmatmul.mubr.f32.gmra.mxu0 %v467
    %v550 = vpop.f32.mrf.mxu0
    %v551 = vadd.f32 %v455, %v550
    %v552 = vpop.f32.mrf.mxu0
    %553 = vdwg.mxu0
    %v554 = vand.u32 2147483647, %v536
    %v555 = vand.u32 2147483647, %v541
    %v556 = vand.u32 2147483647, %v546
    %v557 = vand.u32 2147483647, %v551
    %v558 = vadd.f32 %v554, 1.0
    %v559 = vadd.f32 %v555, 1.0
    %v560 = vadd.f32 %v556, 1.0
    %v561 = vadd.f32 %v557, 1.0
    %v562 = vrcp.pop %v558
    %v563 = vrcp.pop %v559
    %v564 = vrcp.pop %v560
    %v565 = vrcp.pop %v561
    %v566 = vmul.f32 %v536, %v562
    %v567 = vmul.f32 %v541, %v563
    %v568 = vmul.f32 %v546, %v564
    %v569 = vmul.f32 %v551, %v565
    %v570 = vld [vmem:[%s9] sm:$0x1]
    %v571 = vld [vmem:[#allocation2] sm:$0x1]
    %573 = vset.pattern.permute.xlu0 0
    %574 = vperm.xlu0 %573, %v571
    %v575 = vpop.permute.xlu0 %574
    %v577 = vlaneseq
    %v578 = vshrl.u32 %v577, 7
    %v579 = vsub.s32 0, %v578
    %v580 = vrot.slane %v575, %v579
    %v582 = vsel %vm174, %v570, 0
    %584 = vmatprep.subr.mxu0 0.0
    %585 = vmatpush1.msra.mxu0 0.0
    %586 = vmatprep.subr.mxu0 0.0
    %587 = vmatpush1.msra.mxu0 0.0
    %588 = vmatprep.subr.mxu0 0.0
    %589 = vmatpush1.msra.mxu0 0.0
    %590 = vmatprep.subr.mxu0 0.0
    %591 = vmatpush1.msra.mxu0 0.0
    %592 = vmatprep.subr.mxu0 0.0
    %593 = vmatpush1.msra.mxu0 0.0
    %594 = vmatprep.subr.mxu0 0.0
    %595 = vmatpush1.msra.mxu0 0.0
    %596 = vmatprep.subr.mxu0 0.0
    %597 = vmatpush1.msra.mxu0 0.0
    %598 = vmatprep.subr.mxu0 0.0
    %599 = vmatpush1.msra.mxu0 0.0
    %600 = vmatprep.subr.mxu0 0.0
    %601 = vmatpush1.msra.mxu0 0.0
    %602 = vmatprep.subr.mxu0 0.0
    %603 = vmatpush1.msra.mxu0 0.0
    %604 = vmatprep.subr.mxu0 0.0
    %605 = vmatpush1.msra.mxu0 0.0
    %606 = vmatprep.subr.mxu0 0.0
    %607 = vmatpush1.msra.mxu0 0.0
    %608 = vmatprep.subr.mxu0 0.0
    %609 = vmatpush1.msra.mxu0 %v569
    %610 = vmatprep.subr.mxu0 0.0
    %611 = vmatpush1.msra.mxu0 %v568
    %612 = vmatprep.subr.mxu0 0.0
    %613 = vmatpush1.msra.mxu0 %v567
    %614 = vmatprep.subr.mxu0 0.0
    %615 = vmatpush1.msra.mxu0 %v566
    %616 = vmatprep.subr.mxu0 0.0
    %617 = vmatpush2.msra.mxu0 0.0
    %618 = vmatprep.subr.mxu0 0.0
    %619 = vmatpush2.msra.mxu0 0.0
    %620 = vmatprep.subr.mxu0 0.0
    %621 = vmatpush2.msra.mxu0 0.0
    %622 = vmatprep.subr.mxu0 0.0
    %623 = vmatpush2.msra.mxu0 0.0
    %624 = vmatprep.subr.mxu0 0.0
    %625 = vmatpush2.msra.mxu0 0.0
    %626 = vmatprep.subr.mxu0 0.0
    %627 = vmatpush2.msra.mxu0 0.0
    %628 = vmatprep.subr.mxu0 0.0
    %629 = vmatpush2.msra.mxu0 0.0
    %630 = vmatprep.subr.mxu0 0.0
    %631 = vmatpush2.msra.mxu0 0.0
    %632 = vmatprep.subr.mxu0 0.0
    %633 = vmatpush2.msra.mxu0 0.0
    %634 = vmatprep.subr.mxu0 0.0
    %635 = vmatpush2.msra.mxu0 0.0
    %636 = vmatprep.subr.mxu0 0.0
    %637 = vmatpush2.msra.mxu0 0.0
    %638 = vmatprep.subr.mxu0 0.0
    %639 = vmatpush2.msra.mxu0 0.0
    %640 = vmatprep.subr.mxu0 0.0
    %641 = vmatpush2.msra.mxu0 0.0
    %642 = vmatprep.subr.mxu0 0.0
    %643 = vmatpush2.msra.mxu0 0.0
    %644 = vmatprep.subr.mxu0 0.0
    %645 = vmatpush2.msra.mxu0 0.0
    %646 = vmatprep.subr.mxu0 0.0
    %647 = vmatpush2.msra.mxu0 0.0
    %648 = vmatprep.mubr.f32.mxu0 0.0
    %649 = vmatmul.mubr.f32.gmra.mxu0 %v582
    %v650 = vpop.f32.mrf.mxu0
    %v651 = vadd.f32 %v580, %v650
    %v652 = vpop.f32.mrf.mxu0
    %653 = vdwg.mxu0
    %654 = vst [vmem:[#allocation3] sm:$0x1] %v651
    // Predicated region
    $region46: #{tpu_custom_call.1} parent=1 // pred_check
      _
    $region47: #{tpu_custom_call.1} parent=1 // pred_check_branch
      %656 = sbr.rel (0) target = $region49
    $region48: #{tpu_custom_call.1} parent=1 // pred_region
      %s658 = ssub.s32 16, 16
      %659 = vsyncadd [#allocation4], %s658
      %s661 = sshll.u32 [#allocation3], 4
      %s662 = int_to_ptr.vmem [resolvable:$true] %s661
      %664 = dma.vmem_to_hbm [thread:$0]  %s662, 16, %s11, [#allocation4]
    $region49: #{tpu_custom_call.1} parent=1 // pred_fallthru
      _
    // Predicated region
    $region50: #{tpu_custom_call.1} parent=1 // pred_check
      _
    $region51: #{tpu_custom_call.1} parent=1 // pred_check_branch
      %666 = sbr.rel (0) target = $region53
    $region52: #{tpu_custom_call.1} parent=1 // pred_region
      %667 = dma.done [#allocation4], 16
    $region53: #{tpu_custom_call.1} parent=1 // pred_fallthru
      _
    %668 = vsyncpa [#allocation4], 1

</llo_original>
